<compile_context>
chip_gen: v7x
topology: tpu7x:2x2x1
jax: 0.10.0
libtpu: 0.0.40
codegen_flags: <defaults>
</compile_context>

<pallas_src>
import jax
import jax.numpy as jnp
from jax.experimental import pallas as pl
from jax.experimental.pallas import tpu as pltpu

LN_EPS = 1e-5
LANES = 128


def _round_up(x, m):
    return -(-x // m) * m


def _layernorm(x, gamma, beta):
    # E[x^2] - mean^2 form: the two cross-lane reductions are independent and
    # can issue back-to-back on the XLUs (vs. mean -> sub -> square -> mean).
    m = jnp.mean(x, axis=-1, keepdims=True)
    m2 = jnp.mean(x * x, axis=-1, keepdims=True)
    var = m2 - m * m
    return (x - m) * jax.lax.rsqrt(var + LN_EPS) * gamma + beta


def _build_kernel(P, Hs, H, Din):
    """Fused Critic kernel specialized to static dims.

    Weight-slab row layout (all offsets are multiples of 8):
      [0, Din)        fused input matmul weights (obs|state|act -> 128 lanes)
      [Din, +Hs)      state-encoder layer-2 weight (lanes 0:P)
      [.., +P)        fused Q layer-1 obs part    (lanes 0:2H)
      [.., +2H)       block-diag Q layer-2        (lanes 0:2H)
      [.., +2H)       block-diag Q layer-3        (lanes 0:2)
      [.., +16)       bias / LayerNorm vectors, one per sublane row
    """
    H2 = 2 * H
    o_sw2 = Din
    o_w1o = o_sw2 + Hs
    o_w2 = o_w1o + P
    o_w3 = o_w2 + H2
    o_vec = o_w3 + H2

    def kernel(x_ref, w_ref, out_ref):
        x = x_ref[...]                                    # (TB, Din)

        # ---- fused input matmul: one MXU push computes
        #   lanes [0,P)        = obs @ pw            (projection pre-act)
        #   lanes [P,P+Hs)     = state @ sw1         (state layer-1 pre-act)
        #   lanes [P+Hs,128)   = action @ W1_act     (Q layer-1 action part)
        w_in = w_ref[0:Din, :]                            # (Din, 128)
        b_in = w_ref[o_vec:o_vec + 1, :]                  # (1, 128)
        pre = jnp.dot(x, w_in, preferred_element_type=jnp.float32) + b_in

        proj_pre = pre[:, 0:P]
        s1 = jnp.maximum(pre[:, P:P + Hs], 0.0)
        act_w1 = pre[:, P + Hs:P + Hs + H2]

        sw2 = w_ref[o_sw2:o_sw2 + Hs, 0:P]
        sb2 = w_ref[o_vec + 3:o_vec + 4, 0:P]
        s_pre = jnp.dot(s1, sw2, preferred_element_type=jnp.float32) + sb2

        pg = w_ref[o_vec + 1:o_vec + 2, 0:P]
        pbe = w_ref[o_vec + 2:o_vec + 3, 0:P]
        sg = w_ref[o_vec + 4:o_vec + 5, 0:P]
        sbe = w_ref[o_vec + 5:o_vec + 6, 0:P]
        h = (jnp.tanh(_layernorm(proj_pre, pg, pbe))
             + jnp.tanh(_layernorm(s_pre, sg, sbe)))      # (TB, P)

        # ---- fused twin Q heads: 3 matmuls for both heads ----------------
        w1o = w_ref[o_w1o:o_w1o + P, 0:H2]
        b1 = w_ref[o_vec + 6:o_vec + 7, 0:H2]
        z1 = jnp.maximum(
            jnp.dot(h, w1o, preferred_element_type=jnp.float32) + act_w1 + b1,
            0.0)

        w2 = w_ref[o_w2:o_w2 + H2, 0:H2]
        b2 = w_ref[o_vec + 7:o_vec + 8, 0:H2]
        z2 = jnp.maximum(
            jnp.dot(z1, w2, preferred_element_type=jnp.float32) + b2, 0.0)

        # lane-dense final store: (TB, 128) with q1/q2 in lanes 0/1
        w3 = w_ref[o_w3:o_w3 + H2, :]                     # (2H, 128)
        b3 = w_ref[o_vec + 8:o_vec + 9, :]                # (1, 128)
        out_ref[...] = jnp.dot(z2, w3, preferred_element_type=jnp.float32) + b3

    return kernel


def critic_forward(obs, state, action, w_slab, dims, *, block_b=1024):
    """Fused Critic forward. Returns (q1, q2), each (B, 1) float32."""
    B = obs.shape[0]
    P, Hs, H, Din = dims["P"], dims["Hs"], dims["H"], dims["Din"]

    # ---- batch tile ------------------------------------------------------
    b8 = _round_up(B, 8)
    tb = min(block_b, b8)
    # Keep >= 2 grid steps when possible so ("parallel",) shards the batch
    # across v7x's two TensorCores (harmless no-op on v5e/v6e).
    if b8 >= 16 and tb >= b8:
        tb = _round_up(b8 // 2, 8)
    tb = max(8, (tb // 8) * 8)
    Bp = _round_up(B, tb)

    # ---- single fused [obs | state | action] input slab, lane-padded ------
    x = jnp.concatenate([obs, state, action], axis=1).astype(jnp.float32)
    x = jnp.pad(x, ((0, Bp - B), (0, Din - x.shape[1])))

    kernel = _build_kernel(P, Hs, H, Din)
    R = w_slab.shape[0]

    out = pl.pallas_call(
        kernel,
        out_shape=jax.ShapeDtypeStruct((Bp, LANES), jnp.float32),
        grid=(Bp // tb,),
        in_specs=[pl.BlockSpec((tb, Din), lambda i: (i, 0)),
                  pl.BlockSpec((R, LANES), lambda i: (0, 0))],
        out_specs=pl.BlockSpec((tb, LANES), lambda i: (i, 0)),
        compiler_params=pltpu.CompilerParams(
            dimension_semantics=("parallel",)),
    )(x, w_slab)

    out = out[:B]
    return out[:, 0:1], out[:, 1:2]


# ---------------------------------------------------------------------------
# Deterministic parameter construction (matches PyTorch orthogonal_init:
# Linear weights orthogonal (gain 1), biases zero, LayerNorm weight=1 bias=0),
# packed into a single 128-lane weight slab for the kernel.
# ---------------------------------------------------------------------------
def orthogonal(key, out_dim, in_dim, gain=1.0):
    big, small = max(out_dim, in_dim), min(out_dim, in_dim)
    a = jax.random.normal(key, (big, small), dtype=jnp.float32)
    q, r = jnp.linalg.qr(a)
    q = q * jnp.sign(jnp.diagonal(r))
    if out_dim < in_dim:
        q = q.T
    return (gain * q[:out_dim, :in_dim]).astype(jnp.float32)


def make_params(key, out_dim, projection_dim, state_dim, action_dim,
                hidden_dim, hidden_dim_state):
    P, A, H, Hs = projection_dim, action_dim, hidden_dim, hidden_dim_state
    H2 = 2 * H
    # In-kernel sublane slice starts are Din / Hs / P / 2H-based; keep aligned.
    assert P % 8 == 0 and Hs % 8 == 0 and H % 8 == 0
    assert P + Hs + H2 <= LANES, "fused layer-1 output must fit in 128 lanes"

    keys = jax.random.split(key, 9)

    def lin(k, in_d, out_d):
        # PyTorch nn.Linear weight is (out, in); transpose to (in, out).
        w = orthogonal(k, out_d, in_d).T
        b = jnp.zeros((out_d,), jnp.float32)
        return w, b

    pw, pb = lin(keys[0], out_dim, P)
    sw1, sb1 = lin(keys[1], state_dim, Hs)
    sw2, sb2 = lin(keys[2], Hs, P)
    pg = jnp.ones((P,), jnp.float32)
    pbe = jnp.zeros((P,), jnp.float32)
    sg = jnp.ones((P,), jnp.float32)
    sbe = jnp.zeros((P,), jnp.float32)

    q1w1, q1b1 = lin(keys[3], P + A, H)
    q1w2, q1b2 = lin(keys[4], H, H)
    q1w3, q1b3 = lin(keys[5], H, 1)
    q2w1, q2b1 = lin(keys[6], P + A, H)
    q2w2, q2b2 = lin(keys[7], H, H)
    q2w3, q2b3 = lin(keys[8], H, 1)

    Din = max(64, _round_up(out_dim + state_dim + A, 8))

    # fused twin-head layer-1 splits
    w1o = jnp.concatenate([q1w1[:P], q2w1[:P]], axis=1)          # (P, 2H)
    w1a = jnp.concatenate([q1w1[P:], q2w1[P:]], axis=1)          # (A, 2H)

    # --- single 128-lane weight slab ---------------------------------------
    w_in = jnp.zeros((Din, LANES), jnp.float32)
    w_in = w_in.at[0:out_dim, 0:P].set(pw)
    w_in = w_in.at[out_dim:out_dim + state_dim, P:P + Hs].set(sw1)
    w_in = w_in.at[out_dim + state_dim:out_dim + state_dim + A,
                   P + Hs:P + Hs + H2].set(w1a)

    w_s2 = jnp.zeros((Hs, LANES), jnp.float32).at[:, 0:P].set(sw2)
    w_1o = jnp.zeros((P, LANES), jnp.float32).at[:, 0:H2].set(w1o)
    w_2 = jnp.zeros((H2, LANES), jnp.float32)
    w_2 = w_2.at[0:H, 0:H].set(q1w2).at[H:H2, H:H2].set(q2w2)
    w_3 = jnp.zeros((H2, LANES), jnp.float32)
    w_3 = w_3.at[0:H, 0:1].set(q1w3).at[H:H2, 1:2].set(q2w3)

    vec = jnp.zeros((16, LANES), jnp.float32)
    vec = vec.at[0, 0:P].set(pb).at[0, P:P + Hs].set(sb1)     # input-matmul bias
    vec = vec.at[1, 0:P].set(pg).at[2, 0:P].set(pbe)
    vec = vec.at[3, 0:P].set(sb2).at[4, 0:P].set(sg).at[5, 0:P].set(sbe)
    vec = vec.at[6, 0:H2].set(jnp.concatenate([q1b1, q2b1]))
    vec = vec.at[7, 0:H2].set(jnp.concatenate([q1b2, q2b2]))
    vec = vec.at[8, 0:2].set(jnp.concatenate([q1b3, q2b3]))

    w_slab = jnp.concatenate([w_in, w_s2, w_1o, w_2, w_3, vec], axis=0)

    dims = dict(out_dim=out_dim, state_dim=state_dim, act_dim=A,
                P=P, Hs=Hs, H=H, Din=Din)
    raw = dict(pw=pw, pb=pb, pg=pg, pbe=pbe,
               sw1=sw1, sb1=sb1, sw2=sw2, sb2=sb2, sg=sg, sbe=sbe,
               q1=(q1w1, q1b1, q1w2, q1b2, q1w3, q1b3),
               q2=(q2w1, q2b1, q2w2, q2b2, q2w3, q2b3))
    return w_slab, raw, dims


def reference_forward(obs, state, action, raw):
    def ln(x, g, b):
        m = jnp.mean(x, -1, keepdims=True)
        v = jnp.mean((x - m) ** 2, -1, keepdims=True)
        return (x - m) / jnp.sqrt(v + LN_EPS) * g + b

    o = jnp.tanh(ln(obs @ raw["pw"] + raw["pb"], raw["pg"], raw["pbe"]))
    s = jnp.maximum(state @ raw["sw1"] + raw["sb1"], 0.0)
    s = jnp.tanh(ln(s @ raw["sw2"] + raw["sb2"], raw["sg"], raw["sbe"]))
    h = jnp.concatenate([o + s, action], axis=-1)

    def q(p):
        w1, b1, w2, b2, w3, b3 = p
        x = jnp.maximum(h @ w1 + b1, 0.0)
        x = jnp.maximum(x @ w2 + b2, 0.0)
        return x @ w3 + b3

    return q(raw["q1"]), q(raw["q2"])


if __name__ == "__main__":
    B = 8
    out_dim = 32          # encoder output dim fed to `projection`
    projection_dim = 32
    state_dim = 16        # state_shape = (16,)
    action_dim = 4        # action_shape = (4,)
    hidden_dim = 32
    hidden_dim_state = 32

    key = jax.random.PRNGKey(0)
    k_obs, k_state, k_act, k_par = jax.random.split(key, 4)
    obs = jax.random.normal(k_obs, (B, out_dim), dtype=jnp.float32)
    state = jax.random.normal(k_state, (B, state_dim), dtype=jnp.float32)
    action = jax.random.normal(k_act, (B, action_dim), dtype=jnp.float32)

    w_slab, raw, dims = make_params(k_par, out_dim, projection_dim, state_dim,
                                    action_dim, hidden_dim, hidden_dim_state)

    q1, q2 = critic_forward(obs, state, action, w_slab, dims)
    q1, q2 = jax.block_until_ready((q1, q2))

    r1, r2 = reference_forward(obs, state, action, raw)
    assert q1.shape == (B, 1) and q2.shape == (B, 1)
    assert jnp.allclose(q1, r1, atol=1e-4, rtol=1e-4)
    assert jnp.allclose(q2, r2, atol=1e-4, rtol=1e-4)
    print("KERNEL_OK")
</pallas_src>

<mosaic_0001>
module attributes {stable_mosaic.version = 11 : i64} {
  func.func @kernel(%arg0: i32, %arg1: memref<8x64xf32, #tpu.memory_space<vmem>>, %arg2: memref<272x128xf32, #tpu.memory_space<vmem>>, %arg3: memref<8x128xf32, #tpu.memory_space<vmem>>) attributes {dimension_semantics = [#tpu.dimension_semantics<parallel>], iteration_bounds = array<i64: 1>, scalar_prefetch = 0 : i64, scratch_operands = 0 : i64, tpu.core_type = #tpu.core_type<tc>, window_params = [{transform_indices = @transform_0, window_bounds = array<i64: 8, 64>}, {pipeline_mode = #tpu.pipeline_mode<synchronous>, transform_indices = @transform_1, window_bounds = array<i64: 272, 128>}, {transform_indices = @transform_2, window_bounds = array<i64: 8, 128>}]} {
    %c0 = arith.constant 0 : index
    %c0_0 = arith.constant 0 : index
    %0 = vector.load %arg1[%c0, %c0_0] : memref<8x64xf32, #tpu.memory_space<vmem>>, vector<8x64xf32>
    %c0_1 = arith.constant 0 : index
    %c0_2 = arith.constant 0 : index
    %1 = vector.load %arg2[%c0_1, %c0_2] : memref<272x128xf32, #tpu.memory_space<vmem>>, vector<64x128xf32>
    %c256 = arith.constant 256 : index
    %c0_3 = arith.constant 0 : index
    %2 = vector.load %arg2[%c256, %c0_3] : memref<272x128xf32, #tpu.memory_space<vmem>>, vector<1x128xf32>
    %cst = arith.constant dense<0.000000e+00> : vector<8x128xf32>
    %3 = tpu.matmul %0, %1, %cst {dimension_numbers = #tpu.dot_dimension_numbers<[1], [0], [0], [1], [0, 0, 1, 1], [], []>} : vector<8x64xf32>, vector<64x128xf32>, vector<8x128xf32> -> vector<8x128xf32>
    %4 = vector.broadcast %2 : vector<1x128xf32> to vector<8x128xf32>
    %5 = arith.addf %3, %4 : vector<8x128xf32>
    %6 = vector.extract_strided_slice %5 {offsets = [0, 0], sizes = [8, 32], strides = [1, 1]} : vector<8x128xf32> to vector<8x32xf32>
    %7 = vector.extract_strided_slice %5 {offsets = [0, 32], sizes = [8, 32], strides = [1, 1]} : vector<8x128xf32> to vector<8x32xf32>
    %cst_4 = arith.constant 0.000000e+00 : f32
    %8 = vector.broadcast %cst_4 : f32 to vector<8x32xf32>
    %9 = arith.maximumf %7, %8 : vector<8x32xf32>
    %10 = vector.extract_strided_slice %5 {offsets = [0, 64], sizes = [8, 64], strides = [1, 1]} : vector<8x128xf32> to vector<8x64xf32>
    %c64 = arith.constant 64 : index
    %c0_5 = arith.constant 0 : index
    %11 = vector.load %arg2[%c64, %c0_5] : memref<272x128xf32, #tpu.memory_space<vmem>>, vector<32x32xf32>
    %c259 = arith.constant 259 : index
    %c0_6 = arith.constant 0 : index
    %12 = vector.load %arg2[%c259, %c0_6] : memref<272x128xf32, #tpu.memory_space<vmem>>, vector<1x32xf32>
    %cst_7 = arith.constant dense<0.000000e+00> : vector<8x32xf32>
    %13 = tpu.matmul %9, %11, %cst_7 {dimension_numbers = #tpu.dot_dimension_numbers<[1], [0], [0], [1], [0, 0, 1, 1], [], []>} : vector<8x32xf32>, vector<32x32xf32>, vector<8x32xf32> -> vector<8x32xf32>
    %14 = vector.broadcast %12 : vector<1x32xf32> to vector<8x32xf32>
    %15 = arith.addf %13, %14 : vector<8x32xf32>
    %c257 = arith.constant 257 : index
    %c0_8 = arith.constant 0 : index
    %16 = vector.load %arg2[%c257, %c0_8] : memref<272x128xf32, #tpu.memory_space<vmem>>, vector<1x32xf32>
    %c258 = arith.constant 258 : index
    %c0_9 = arith.constant 0 : index
    %17 = vector.load %arg2[%c258, %c0_9] : memref<272x128xf32, #tpu.memory_space<vmem>>, vector<1x32xf32>
    %c260 = arith.constant 260 : index
    %c0_10 = arith.constant 0 : index
    %18 = vector.load %arg2[%c260, %c0_10] : memref<272x128xf32, #tpu.memory_space<vmem>>, vector<1x32xf32>
    %c261 = arith.constant 261 : index
    %c0_11 = arith.constant 0 : index
    %19 = vector.load %arg2[%c261, %c0_11] : memref<272x128xf32, #tpu.memory_space<vmem>>, vector<1x32xf32>
    %cst_12 = arith.constant dense<0.000000e+00> : vector<8xf32>
    %20 = vector.multi_reduction <add>, %6, %cst_12 [1] : vector<8x32xf32> to vector<8xf32>
    %21 = vector.shape_cast %20 : vector<8xf32> to vector<8x1xf32>
    %cst_13 = arith.constant 3.200000e+01 : f32
    %22 = vector.broadcast %cst_13 : f32 to vector<8x1xf32>
    %23 = arith.divf %21, %22 : vector<8x1xf32>
    %24 = arith.mulf %6, %6 : vector<8x32xf32>
    %cst_14 = arith.constant dense<0.000000e+00> : vector<8xf32>
    %25 = vector.multi_reduction <add>, %24, %cst_14 [1] : vector<8x32xf32> to vector<8xf32>
    %26 = vector.shape_cast %25 : vector<8xf32> to vector<8x1xf32>
    %cst_15 = arith.constant 3.200000e+01 : f32
    %27 = vector.broadcast %cst_15 : f32 to vector<8x1xf32>
    %28 = arith.divf %26, %27 : vector<8x1xf32>
    %29 = arith.mulf %23, %23 : vector<8x1xf32>
    %30 = arith.subf %28, %29 : vector<8x1xf32>
    %31 = vector.broadcast %23 : vector<8x1xf32> to vector<8x32xf32>
    %32 = arith.subf %6, %31 : vector<8x32xf32>
    %cst_16 = arith.constant 9.99999974E-6 : f32
    %33 = vector.broadcast %cst_16 : f32 to vector<8x1xf32>
    %34 = arith.addf %30, %33 : vector<8x1xf32>
    %35 = math.rsqrt %34 : vector<8x1xf32>
    %36 = vector.broadcast %35 : vector<8x1xf32> to vector<8x32xf32>
    %37 = arith.mulf %32, %36 : vector<8x32xf32>
    %38 = vector.broadcast %16 : vector<1x32xf32> to vector<8x32xf32>
    %39 = arith.mulf %37, %38 : vector<8x32xf32>
    %40 = vector.broadcast %17 : vector<1x32xf32> to vector<8x32xf32>
    %41 = arith.addf %39, %40 : vector<8x32xf32>
    %42 = math.tanh %41 : vector<8x32xf32>
    %cst_17 = arith.constant dense<0.000000e+00> : vector<8xf32>
    %43 = vector.multi_reduction <add>, %15, %cst_17 [1] : vector<8x32xf32> to vector<8xf32>
    %44 = vector.shape_cast %43 : vector<8xf32> to vector<8x1xf32>
    %cst_18 = arith.constant 3.200000e+01 : f32
    %45 = vector.broadcast %cst_18 : f32 to vector<8x1xf32>
    %46 = arith.divf %44, %45 : vector<8x1xf32>
    %47 = arith.mulf %15, %15 : vector<8x32xf32>
    %cst_19 = arith.constant dense<0.000000e+00> : vector<8xf32>
    %48 = vector.multi_reduction <add>, %47, %cst_19 [1] : vector<8x32xf32> to vector<8xf32>
    %49 = vector.shape_cast %48 : vector<8xf32> to vector<8x1xf32>
    %cst_20 = arith.constant 3.200000e+01 : f32
    %50 = vector.broadcast %cst_20 : f32 to vector<8x1xf32>
    %51 = arith.divf %49, %50 : vector<8x1xf32>
    %52 = arith.mulf %46, %46 : vector<8x1xf32>
    %53 = arith.subf %51, %52 : vector<8x1xf32>
    %54 = vector.broadcast %46 : vector<8x1xf32> to vector<8x32xf32>
    %55 = arith.subf %15, %54 : vector<8x32xf32>
    %cst_21 = arith.constant 9.99999974E-6 : f32
    %56 = vector.broadcast %cst_21 : f32 to vector<8x1xf32>
    %57 = arith.addf %53, %56 : vector<8x1xf32>
    %58 = math.rsqrt %57 : vector<8x1xf32>
    %59 = vector.broadcast %58 : vector<8x1xf32> to vector<8x32xf32>
    %60 = arith.mulf %55, %59 : vector<8x32xf32>
    %61 = vector.broadcast %18 : vector<1x32xf32> to vector<8x32xf32>
    %62 = arith.mulf %60, %61 : vector<8x32xf32>
    %63 = vector.broadcast %19 : vector<1x32xf32> to vector<8x32xf32>
    %64 = arith.addf %62, %63 : vector<8x32xf32>
    %65 = math.tanh %64 : vector<8x32xf32>
    %66 = arith.addf %42, %65 : vector<8x32xf32>
    %c96 = arith.constant 96 : index
    %c0_22 = arith.constant 0 : index
    %67 = vector.load %arg2[%c96, %c0_22] : memref<272x128xf32, #tpu.memory_space<vmem>>, vector<32x64xf32>
    %c262 = arith.constant 262 : index
    %c0_23 = arith.constant 0 : index
    %68 = vector.load %arg2[%c262, %c0_23] : memref<272x128xf32, #tpu.memory_space<vmem>>, vector<1x64xf32>
    %cst_24 = arith.constant dense<0.000000e+00> : vector<8x64xf32>
    %69 = tpu.matmul %66, %67, %cst_24 {dimension_numbers = #tpu.dot_dimension_numbers<[1], [0], [0], [1], [0, 0, 1, 1], [], []>} : vector<8x32xf32>, vector<32x64xf32>, vector<8x64xf32> -> vector<8x64xf32>
    %70 = arith.addf %69, %10 : vector<8x64xf32>
    %71 = vector.broadcast %68 : vector<1x64xf32> to vector<8x64xf32>
    %72 = arith.addf %70, %71 : vector<8x64xf32>
    %cst_25 = arith.constant 0.000000e+00 : f32
    %73 = vector.broadcast %cst_25 : f32 to vector<8x64xf32>
    %74 = arith.maximumf %72, %73 : vector<8x64xf32>
    %c128 = arith.constant 128 : index
    %c0_26 = arith.constant 0 : index
    %75 = vector.load %arg2[%c128, %c0_26] : memref<272x128xf32, #tpu.memory_space<vmem>>, vector<64x64xf32>
    %c263 = arith.constant 263 : index
    %c0_27 = arith.constant 0 : index
    %76 = vector.load %arg2[%c263, %c0_27] : memref<272x128xf32, #tpu.memory_space<vmem>>, vector<1x64xf32>
    %cst_28 = arith.constant dense<0.000000e+00> : vector<8x64xf32>
    %77 = tpu.matmul %74, %75, %cst_28 {dimension_numbers = #tpu.dot_dimension_numbers<[1], [0], [0], [1], [0, 0, 1, 1], [], []>} : vector<8x64xf32>, vector<64x64xf32>, vector<8x64xf32> -> vector<8x64xf32>
    %78 = vector.broadcast %76 : vector<1x64xf32> to vector<8x64xf32>
    %79 = arith.addf %77, %78 : vector<8x64xf32>
    %cst_29 = arith.constant 0.000000e+00 : f32
    %80 = vector.broadcast %cst_29 : f32 to vector<8x64xf32>
    %81 = arith.maximumf %79, %80 : vector<8x64xf32>
    %c192 = arith.constant 192 : index
    %c0_30 = arith.constant 0 : index
    %82 = vector.load %arg2[%c192, %c0_30] : memref<272x128xf32, #tpu.memory_space<vmem>>, vector<64x128xf32>
    %c264 = arith.constant 264 : index
    %c0_31 = arith.constant 0 : index
    %83 = vector.load %arg2[%c264, %c0_31] : memref<272x128xf32, #tpu.memory_space<vmem>>, vector<1x128xf32>
    %cst_32 = arith.constant dense<0.000000e+00> : vector<8x128xf32>
    %84 = tpu.matmul %81, %82, %cst_32 {dimension_numbers = #tpu.dot_dimension_numbers<[1], [0], [0], [1], [0, 0, 1, 1], [], []>} : vector<8x64xf32>, vector<64x128xf32>, vector<8x128xf32> -> vector<8x128xf32>
    %85 = vector.broadcast %83 : vector<1x128xf32> to vector<8x128xf32>
    %86 = arith.addf %84, %85 : vector<8x128xf32>
    %c0_33 = arith.constant 0 : index
    %c0_34 = arith.constant 0 : index
    %87 = vector.load %arg3[%c0_33, %c0_34] : memref<8x128xf32, #tpu.memory_space<vmem>>, vector<8x128xf32>
    tpu.vector_store %arg3[%c0_33, %c0_34], %86 {strides = array<i32>} : memref<8x128xf32, #tpu.memory_space<vmem>>, vector<8x128xf32>,
    return
  }
  func.func @transform_0(%arg0: i32) -> (i32, i32) {
    %c0_i32 = arith.constant 0 : i32
    %c0_i32_0 = arith.constant 0 : i32
    return %arg0, %c0_i32 : i32, i32
  }
  func.func @transform_1(%arg0: i32) -> (i32, i32) {
    %c0_i32 = arith.constant 0 : i32
    %c0_i32_0 = arith.constant 0 : i32
    %c0_i32_1 = arith.constant 0 : i32
    return %c0_i32, %c0_i32_0 : i32, i32
  }
  func.func @transform_2(%arg0: i32) -> (i32, i32) {
    %c0_i32 = arith.constant 0 : i32
    %c0_i32_0 = arith.constant 0 : i32
    return %arg0, %c0_i32 : i32, i32
  }
}

</mosaic_0001>

<llo_original>
// kernel: tpu_custom_call.1
$region0: #{tpu_custom_call.1}
  #allocation0 [shape = 'u32[]', space=smem, size = 0x4, offset = 0x4, fixed_abs, tag = 'smem constant byte address 0x4 - core index']
  #allocation1 [shape = 'u32[144,128]{1,0:T(1,128)}', space=vmem, size = 0x12000, scoped, tag = 'internal scratch']
  %s0 = inlined_call_operand.hbm [shape: f32[8,64], index: 0, kind: input, shape index: {}]
  %s1 = inlined_call_operand.hbm [shape: f32[272,128], index: 1, kind: input, shape index: {}]
  %s2 = inlined_call_operand.hbm [shape: f32[8,128], index: 2, kind: output, shape index: {}]
  %s3 = sld [smem:[#allocation0]]
  $region26: #{tpu_custom_call.1} parent=0
    _
  %s5 = ssub.s32 1, %s3
  %s6 = scalar_select 0, %s5, %s3
  $region1: #{tpu_custom_call.1} parent=0
    #allocation2 [shape = 'u8[4096]{0}', space=vmem, size = 0x1000, scoped, tag = 'input window, operand 0, single buffered']
    #allocation3 [shape = 's32[1]{0}', space=sflag, size = 0x4, scoped, tag = 'scoped memory for tpu_custom_call.1']
    #allocation4 [shape = 's32[1]{0}', space=sflag, size = 0x4, scoped, tag = 'scoped memory for tpu_custom_call.1']
    #allocation5 [shape = 'u8[139264]{0}', space=vmem, size = 0x22000, scoped, tag = 'input window, operand 1, single buffered']
    #allocation6 [shape = 's32[1]{0}', space=sflag, size = 0x4, scoped, tag = 'scoped memory for tpu_custom_call.1']
    #allocation7 [shape = 'u8[4096]{0}', space=vmem, size = 0x1000, scoped, tag = 'output window, operand 0, single buffered']
    %7 = vsyncpa [#allocation3], 0
    %8 = vsyncpa [#allocation6], 0
    %9 = vsyncpa [#allocation4], 0
    // Predicated region
    $region2: #{tpu_custom_call.1} parent=1 // pred_check
      _
    $region3: #{tpu_custom_call.1} parent=1 // pred_check_branch
      %11 = sbr.rel (0) target = $region5
    $region4: #{tpu_custom_call.1} parent=1 // pred_region
      %s13 = ssub.s32 128, 128
      %14 = vsyncadd [#allocation3], %s13
      %s16 = sshll.u32 [#allocation2], 4
      %s17 = int_to_ptr.vmem [resolvable:$true] %s16
      %19 = dma.hbm_to_vmem [thread:$0]  %s0, 128, %s17, [#allocation3]
    $region5: #{tpu_custom_call.1} parent=1 // pred_fallthru
      _
    // Predicated region
    $region6: #{tpu_custom_call.1} parent=1 // pred_check
      _
    $region7: #{tpu_custom_call.1} parent=1 // pred_check_branch
      %21 = sbr.rel (0) target = $region9
    $region8: #{tpu_custom_call.1} parent=1 // pred_region
      %s23 = ssub.s32 4352, 4352
      %24 = vsyncadd [#allocation6], %s23
      %s25 = sshll.u32 [#allocation5], 4
      %s26 = int_to_ptr.vmem [resolvable:$true] %s25
      %31 = dma.hbm_to_vmem [thread:$0]  %s1, 4352, %s26, [#allocation6], 128, 128, 8
    $region9: #{tpu_custom_call.1} parent=1 // pred_fallthru
      _
    // Predicated region
    $region10: #{tpu_custom_call.1} parent=1 // pred_check
      _
    $region11: #{tpu_custom_call.1} parent=1 // pred_check_branch
      %33 = sbr.rel (0) target = $region13
    $region12: #{tpu_custom_call.1} parent=1 // pred_region
      %34 = dma.done [#allocation3], 128
    $region13: #{tpu_custom_call.1} parent=1 // pred_fallthru
      _
    // Predicated region
    $region14: #{tpu_custom_call.1} parent=1 // pred_check
      _
    $region15: #{tpu_custom_call.1} parent=1 // pred_check_branch
      %36 = sbr.rel (0) target = $region17
    $region16: #{tpu_custom_call.1} parent=1 // pred_region
      %37 = dma.done [#allocation6], 4352
    $region17: #{tpu_custom_call.1} parent=1 // pred_fallthru
      _
    %v38 = vld [vmem:[#allocation2] sm:$0xff]
    %v39 = vld [vmem:[#allocation5] sm:$0xff]
    %v40 = vld [vmem:[#allocation5 + $0x8] sm:$0xff]
    %v41 = vld [vmem:[#allocation5 + $0x10] sm:$0xff]
    %v42 = vld [vmem:[#allocation5 + $0x18] sm:$0xff]
    %v43 = vld [vmem:[#allocation5 + $0x20] sm:$0xff]
    %v44 = vld [vmem:[#allocation5 + $0x28] sm:$0xff]
    %v45 = vld [vmem:[#allocation5 + $0x30] sm:$0xff]
    %v46 = vld [vmem:[#allocation5 + $0x38] sm:$0xff]
    %v47 = vld [vmem:[#allocation5 + $0x100] sm:$0x1]
    %v48 = vlaneseq
    %v49 = vshrl.u32 %v48, 7
    %v50 = vsub.s32 0, %v49
    %v51 = vrot.slane %v47, %v50
    %vm52 = vcmask 523264
    %v54 = vsel %vm52, %v38, 0
    %56 = vmatprep.subr.mxu0 0.0
    %57 = vmatpush1.msra.mxu0 %v39
    %58 = vmatprep.subr.mxu0 0.0
    %59 = vmatpush1.msra.mxu0 %v40
    %60 = vmatprep.subr.mxu0 0.0
    %61 = vmatpush1.msra.mxu0 %v41
    %62 = vmatprep.subr.mxu0 0.0
    %63 = vmatpush1.msra.mxu0 %v42
    %64 = vmatprep.subr.mxu0 0.0
    %65 = vmatpush1.msra.mxu0 %v43
    %66 = vmatprep.subr.mxu0 0.0
    %67 = vmatpush1.msra.mxu0 %v44
    %68 = vmatprep.subr.mxu0 0.0
    %69 = vmatpush1.msra.mxu0 %v45
    %70 = vmatprep.subr.mxu0 0.0
    %71 = vmatpush1.msra.mxu0 %v46
    %72 = vmatprep.subr.mxu0 0.0
    %73 = vmatpush1.msra.mxu0 0.0
    %74 = vmatprep.subr.mxu0 0.0
    %75 = vmatpush1.msra.mxu0 0.0
    %76 = vmatprep.subr.mxu0 0.0
    %77 = vmatpush1.msra.mxu0 0.0
    %78 = vmatprep.subr.mxu0 0.0
    %79 = vmatpush1.msra.mxu0 0.0
    %80 = vmatprep.subr.mxu0 0.0
    %81 = vmatpush1.msra.mxu0 0.0
    %82 = vmatprep.subr.mxu0 0.0
    %83 = vmatpush1.msra.mxu0 0.0
    %84 = vmatprep.subr.mxu0 0.0
    %85 = vmatpush1.msra.mxu0 0.0
    %86 = vmatprep.subr.mxu0 0.0
    %87 = vmatpush1.msra.mxu0 0.0
    %88 = vmatprep.subr.mxu0 0.0
    %89 = vmatpush1.msra.mxu0 0.0
    %90 = vmatprep.subr.mxu0 0.0
    %91 = vmatpush1.msra.mxu0 0.0
    %92 = vmatprep.subr.mxu0 0.0
    %93 = vmatpush1.msra.mxu0 0.0
    %94 = vmatprep.subr.mxu0 0.0
    %95 = vmatpush1.msra.mxu0 0.0
    %96 = vmatprep.subr.mxu0 0.0
    %97 = vmatpush1.msra.mxu0 0.0
    %98 = vmatprep.subr.mxu0 0.0
    %99 = vmatpush1.msra.mxu0 0.0
    %100 = vmatprep.subr.mxu0 0.0
    %101 = vmatpush1.msra.mxu0 0.0
    %102 = vmatprep.subr.mxu0 0.0
    %103 = vmatpush1.msra.mxu0 0.0
    %104 = vmatprep.subr.mxu0 0.0
    %105 = vmatpush1.msra.mxu0 0.0
    %106 = vmatprep.subr.mxu0 0.0
    %107 = vmatpush1.msra.mxu0 0.0
    %108 = vmatprep.subr.mxu0 0.0
    %109 = vmatpush1.msra.mxu0 0.0
    %110 = vmatprep.subr.mxu0 0.0
    %111 = vmatpush1.msra.mxu0 0.0
    %112 = vmatprep.subr.mxu0 0.0
    %113 = vmatpush1.msra.mxu0 0.0
    %114 = vmatprep.subr.mxu0 0.0
    %115 = vmatpush1.msra.mxu0 0.0
    %116 = vmatprep.subr.mxu0 0.0
    %117 = vmatpush1.msra.mxu0 0.0
    %118 = vmatprep.subr.mxu0 0.0
    %119 = vmatpush1.msra.mxu0 0.0
    %120 = vmatprep.mubr.f32.mxu0 0.0
    %121 = vmatmul.mubr.f32.gmra.mrb[0].mxu0 %v54
    %v122 = vpop.f32.mrb[0].mxu0
    %v123 = vadd.f32 %v51, %v122
    %v124 = vpop.f32.mrb[0].mxu0
    %125 = vdwg.mxu0
    %v126 = vmax.f32 %v123, 0.0
    %v127 = vld [vmem:[#allocation5 + $0x40] sm:$0xff]
    %v128 = vld [vmem:[#allocation5 + $0x48] sm:$0xff]
    %v129 = vld [vmem:[#allocation5 + $0x50] sm:$0xff]
    %v130 = vld [vmem:[#allocation5 + $0x58] sm:$0xff]
    %v131 = vld [vmem:[#allocation5 + $0x103] sm:$0x1]
    %v132 = vlaneseq
    %v133 = vshrl.u32 %v132, 7
    %v134 = vsub.s32 0, %v133
    %v135 = vrot.slane %v131, %v134
    %137 = vrot.lane.b32.xlu0 %v126, 96
    %v138 = vpop.permute.xlu0 %137
    %vm139 = vcmask 261120
    %v140 = vsel %vm139, %v138, 0
    %142 = vmatprep.subr.mxu0 0.0
    %143 = vmatpush1.msra.mxu0 %v127
    %144 = vmatprep.subr.mxu0 0.0
    %145 = vmatpush1.msra.mxu0 %v128
    %146 = vmatprep.subr.mxu0 0.0
    %147 = vmatpush1.msra.mxu0 %v129
    %148 = vmatprep.subr.mxu0 0.0
    %149 = vmatpush1.msra.mxu0 %v130
    %150 = vmatprep.subr.mxu0 0.0
    %151 = vmatpush1.msra.mxu0 0.0
    %152 = vmatprep.subr.mxu0 0.0
    %153 = vmatpush1.msra.mxu0 0.0
    %154 = vmatprep.subr.mxu0 0.0
    %155 = vmatpush1.msra.mxu0 0.0
    %156 = vmatprep.subr.mxu0 0.0
    %157 = vmatpush1.msra.mxu0 0.0
    %158 = vmatprep.subr.mxu0 0.0
    %159 = vmatpush1.msra.mxu0 0.0
    %160 = vmatprep.subr.mxu0 0.0
    %161 = vmatpush1.msra.mxu0 0.0
    %162 = vmatprep.subr.mxu0 0.0
    %163 = vmatpush1.msra.mxu0 0.0
    %164 = vmatprep.subr.mxu0 0.0
    %165 = vmatpush1.msra.mxu0 0.0
    %166 = vmatprep.subr.mxu0 0.0
    %167 = vmatpush1.msra.mxu0 0.0
    %168 = vmatprep.subr.mxu0 0.0
    %169 = vmatpush1.msra.mxu0 0.0
    %170 = vmatprep.subr.mxu0 0.0
    %171 = vmatpush1.msra.mxu0 0.0
    %172 = vmatprep.subr.mxu0 0.0
    %173 = vmatpush1.msra.mxu0 0.0
    %174 = vmatprep.subr.mxu0 0.0
    %175 = vmatpush1.msra.mxu0 0.0
    %176 = vmatprep.subr.mxu0 0.0
    %177 = vmatpush1.msra.mxu0 0.0
    %178 = vmatprep.subr.mxu0 0.0
    %179 = vmatpush1.msra.mxu0 0.0
    %180 = vmatprep.subr.mxu0 0.0
    %181 = vmatpush1.msra.mxu0 0.0
    %182 = vmatprep.subr.mxu0 0.0
    %183 = vmatpush1.msra.mxu0 0.0
    %184 = vmatprep.subr.mxu0 0.0
    %185 = vmatpush1.msra.mxu0 0.0
    %186 = vmatprep.subr.mxu0 0.0
    %187 = vmatpush1.msra.mxu0 0.0
    %188 = vmatprep.subr.mxu0 0.0
    %189 = vmatpush1.msra.mxu0 0.0
    %190 = vmatprep.subr.mxu0 0.0
    %191 = vmatpush1.msra.mxu0 0.0
    %192 = vmatprep.subr.mxu0 0.0
    %193 = vmatpush1.msra.mxu0 0.0
    %194 = vmatprep.subr.mxu0 0.0
    %195 = vmatpush1.msra.mxu0 0.0
    %196 = vmatprep.subr.mxu0 0.0
    %197 = vmatpush1.msra.mxu0 0.0
    %198 = vmatprep.subr.mxu0 0.0
    %199 = vmatpush1.msra.mxu0 0.0
    %200 = vmatprep.subr.mxu0 0.0
    %201 = vmatpush1.msra.mxu0 0.0
    %202 = vmatprep.subr.mxu0 0.0
    %203 = vmatpush1.msra.mxu0 0.0
    %204 = vmatprep.subr.mxu0 0.0
    %205 = vmatpush1.msra.mxu0 0.0
    %206 = vmatprep.mubr.f32.mxu0 0.0
    %207 = vmatmul.mubr.f32.gmra.mrb[0].mxu0 %v140
    %v208 = vpop.f32.mrb[0].mxu0
    %v209 = vadd.f32 %v135, %v208
    %v210 = vpop.f32.mrb[0].mxu0
    %211 = vdwg.mxu0
    %v212 = vld [vmem:[#allocation5 + $0x101] sm:$0x1]
    %v213 = vld [vmem:[#allocation5 + $0x102] sm:$0x1]
    %v214 = vld [vmem:[#allocation5 + $0x104] sm:$0x1]
    %v215 = vld [vmem:[#allocation5 + $0x105] sm:$0x1]
    %v216 = vsel %vm139, %v123, 0.0
    %217 = vadd.xlane.f32.xlu0 %v216
    %v218 = vpop.xlane.xlu0 %217
    %v219 = vrcp.pop 32.0
    %v220 = vmul.f32 %v218, %v219
    %v221 = vmul.f32 %v123, %v123
    %v222 = vsel %vm139, %v221, 0.0
    %223 = vadd.xlane.f32.xlu0 %v222
    %v224 = vpop.xlane.xlu0 %223
    %v225 = vmul.f32 %v224, %v219
    %v226 = vmul.f32 %v220, %v220
    %v227 = vsub.f32 %v225, %v226
    %v228 = vsub.f32 %v123, %v220
    %v229 = vadd.f32 %v227, 1e-05
    %v230 = vrsqrt.pop %v229
    %v231 = vmul.f32 %v228, %v230
    %v232 = vlaneseq
    %v233 = vshrl.u32 %v232, 7
    %v234 = vsub.s32 0, %v233
    %v235 = vrot.slane %v212, %v234
    %v236 = vmul.f32 %v231, %v235
    %v237 = vlaneseq
    %v238 = vshrl.u32 %v237, 7
    %v239 = vsub.s32 0, %v238
    %v240 = vrot.slane %v213, %v239
    %v241 = vadd.f32 %v236, %v240
    %v242 = vtanh.pop %v241
    %v243 = vsel %vm139, %v209, 0.0
    %244 = vadd.xlane.f32.xlu0 %v243
    %v245 = vpop.xlane.xlu0 %244
    %v246 = vmul.f32 %v245, %v219
    %v247 = vmul.f32 %v209, %v209
    %v248 = vsel %vm139, %v247, 0.0
    %249 = vadd.xlane.f32.xlu0 %v248
    %v250 = vpop.xlane.xlu0 %249
    %v251 = vmul.f32 %v250, %v219
    %v252 = vmul.f32 %v246, %v246
    %v253 = vsub.f32 %v251, %v252
    %v254 = vsub.f32 %v209, %v246
    %v255 = vadd.f32 %v253, 1e-05
    %v256 = vrsqrt.pop %v255
    %v257 = vmul.f32 %v254, %v256
    %v258 = vlaneseq
    %v259 = vshrl.u32 %v258, 7
    %v260 = vsub.s32 0, %v259
    %v261 = vrot.slane %v214, %v260
    %v262 = vmul.f32 %v257, %v261
    %v263 = vlaneseq
    %v264 = vshrl.u32 %v263, 7
    %v265 = vsub.s32 0, %v264
    %v266 = vrot.slane %v215, %v265
    %v267 = vadd.f32 %v262, %v266
    %v268 = vtanh.pop %v267
    %v269 = vadd.f32 %v242, %v268
    %v270 = vld [vmem:[#allocation5 + $0x60] sm:$0xff]
    %v271 = vld [vmem:[#allocation5 + $0x68] sm:$0xff]
    %v272 = vld [vmem:[#allocation5 + $0x70] sm:$0xff]
    %v273 = vld [vmem:[#allocation5 + $0x78] sm:$0xff]
    %v274 = vld [vmem:[#allocation5 + $0x106] sm:$0x1]
    %276 = vrot.lane.b32.xlu0 %v123, 64
    %v277 = vpop.permute.xlu0 %276
    %v280 = vsel %vm139, %v269, 0
    %282 = vmatprep.subr.mxu0 0.0
    %283 = vmatpush1.msra.mxu0 %v270
    %284 = vmatprep.subr.mxu0 0.0
    %285 = vmatpush1.msra.mxu0 %v271
    %286 = vmatprep.subr.mxu0 0.0
    %287 = vmatpush1.msra.mxu0 %v272
    %288 = vmatprep.subr.mxu0 0.0
    %289 = vmatpush1.msra.mxu0 %v273
    %290 = vmatprep.subr.mxu0 0.0
    %291 = vmatpush1.msra.mxu0 0.0
    %292 = vmatprep.subr.mxu0 0.0
    %293 = vmatpush1.msra.mxu0 0.0
    %294 = vmatprep.subr.mxu0 0.0
    %295 = vmatpush1.msra.mxu0 0.0
    %296 = vmatprep.subr.mxu0 0.0
    %297 = vmatpush1.msra.mxu0 0.0
    %298 = vmatprep.subr.mxu0 0.0
    %299 = vmatpush1.msra.mxu0 0.0
    %300 = vmatprep.subr.mxu0 0.0
    %301 = vmatpush1.msra.mxu0 0.0
    %302 = vmatprep.subr.mxu0 0.0
    %303 = vmatpush1.msra.mxu0 0.0
    %304 = vmatprep.subr.mxu0 0.0
    %305 = vmatpush1.msra.mxu0 0.0
    %306 = vmatprep.subr.mxu0 0.0
    %307 = vmatpush1.msra.mxu0 0.0
    %308 = vmatprep.subr.mxu0 0.0
    %309 = vmatpush1.msra.mxu0 0.0
    %310 = vmatprep.subr.mxu0 0.0
    %311 = vmatpush1.msra.mxu0 0.0
    %312 = vmatprep.subr.mxu0 0.0
    %313 = vmatpush1.msra.mxu0 0.0
    %314 = vmatprep.subr.mxu0 0.0
    %315 = vmatpush1.msra.mxu0 0.0
    %316 = vmatprep.subr.mxu0 0.0
    %317 = vmatpush1.msra.mxu0 0.0
    %318 = vmatprep.subr.mxu0 0.0
    %319 = vmatpush1.msra.mxu0 0.0
    %320 = vmatprep.subr.mxu0 0.0
    %321 = vmatpush1.msra.mxu0 0.0
    %322 = vmatprep.subr.mxu0 0.0
    %323 = vmatpush1.msra.mxu0 0.0
    %324 = vmatprep.subr.mxu0 0.0
    %325 = vmatpush1.msra.mxu0 0.0
    %326 = vmatprep.subr.mxu0 0.0
    %327 = vmatpush1.msra.mxu0 0.0
    %328 = vmatprep.subr.mxu0 0.0
    %329 = vmatpush1.msra.mxu0 0.0
    %330 = vmatprep.subr.mxu0 0.0
    %331 = vmatpush1.msra.mxu0 0.0
    %332 = vmatprep.subr.mxu0 0.0
    %333 = vmatpush1.msra.mxu0 0.0
    %334 = vmatprep.subr.mxu0 0.0
    %335 = vmatpush1.msra.mxu0 0.0
    %336 = vmatprep.subr.mxu0 0.0
    %337 = vmatpush1.msra.mxu0 0.0
    %338 = vmatprep.subr.mxu0 0.0
    %339 = vmatpush1.msra.mxu0 0.0
    %340 = vmatprep.subr.mxu0 0.0
    %341 = vmatpush1.msra.mxu0 0.0
    %342 = vmatprep.subr.mxu0 0.0
    %343 = vmatpush1.msra.mxu0 0.0
    %344 = vmatprep.subr.mxu0 0.0
    %345 = vmatpush1.msra.mxu0 0.0
    %346 = vmatprep.mubr.f32.mxu0 0.0
    %347 = vmatmul.mubr.f32.gmra.mrb[0].mxu0 %v280
    %v348 = vpop.f32.mrb[0].mxu0
    %v349 = vadd.f32 %v277, %v348
    %v350 = vpop.f32.mrb[0].mxu0
    %351 = vdwg.mxu0
    %v352 = vlaneseq
    %v353 = vshrl.u32 %v352, 7
    %v354 = vsub.s32 0, %v353
    %v355 = vrot.slane %v274, %v354
    %v356 = vadd.f32 %v349, %v355
    %v357 = vmax.f32 %v356, 0.0
    %v358 = vld [vmem:[#allocation5 + $0x80] sm:$0xff]
    %v359 = vld [vmem:[#allocation5 + $0x88] sm:$0xff]
    %v360 = vld [vmem:[#allocation5 + $0x90] sm:$0xff]
    %v361 = vld [vmem:[#allocation5 + $0x98] sm:$0xff]
    %v362 = vld [vmem:[#allocation5 + $0xa0] sm:$0xff]
    %v363 = vld [vmem:[#allocation5 + $0xa8] sm:$0xff]
    %v364 = vld [vmem:[#allocation5 + $0xb0] sm:$0xff]
    %v365 = vld [vmem:[#allocation5 + $0xb8] sm:$0xff]
    %v366 = vld [vmem:[#allocation5 + $0x107] sm:$0x1]
    %v367 = vlaneseq
    %v368 = vshrl.u32 %v367, 7
    %v369 = vsub.s32 0, %v368
    %v370 = vrot.slane %v366, %v369
    %v372 = vsel %vm52, %v357, 0
    %374 = vmatprep.subr.mxu0 0.0
    %375 = vmatpush1.msra.mxu0 %v358
    %376 = vmatprep.subr.mxu0 0.0
    %377 = vmatpush1.msra.mxu0 %v359
    %378 = vmatprep.subr.mxu0 0.0
    %379 = vmatpush1.msra.mxu0 %v360
    %380 = vmatprep.subr.mxu0 0.0
    %381 = vmatpush1.msra.mxu0 %v361
    %382 = vmatprep.subr.mxu0 0.0
    %383 = vmatpush1.msra.mxu0 %v362
    %384 = vmatprep.subr.mxu0 0.0
    %385 = vmatpush1.msra.mxu0 %v363
    %386 = vmatprep.subr.mxu0 0.0
    %387 = vmatpush1.msra.mxu0 %v364
    %388 = vmatprep.subr.mxu0 0.0
    %389 = vmatpush1.msra.mxu0 %v365
    %390 = vmatprep.subr.mxu0 0.0
    %391 = vmatpush1.msra.mxu0 0.0
    %392 = vmatprep.subr.mxu0 0.0
    %393 = vmatpush1.msra.mxu0 0.0
    %394 = vmatprep.subr.mxu0 0.0
    %395 = vmatpush1.msra.mxu0 0.0
    %396 = vmatprep.subr.mxu0 0.0
    %397 = vmatpush1.msra.mxu0 0.0
    %398 = vmatprep.subr.mxu0 0.0
    %399 = vmatpush1.msra.mxu0 0.0
    %400 = vmatprep.subr.mxu0 0.0
    %401 = vmatpush1.msra.mxu0 0.0
    %402 = vmatprep.subr.mxu0 0.0
    %403 = vmatpush1.msra.mxu0 0.0
    %404 = vmatprep.subr.mxu0 0.0
    %405 = vmatpush1.msra.mxu0 0.0
    %406 = vmatprep.subr.mxu0 0.0
    %407 = vmatpush1.msra.mxu0 0.0
    %408 = vmatprep.subr.mxu0 0.0
    %409 = vmatpush1.msra.mxu0 0.0
    %410 = vmatprep.subr.mxu0 0.0
    %411 = vmatpush1.msra.mxu0 0.0
    %412 = vmatprep.subr.mxu0 0.0
    %413 = vmatpush1.msra.mxu0 0.0
    %414 = vmatprep.subr.mxu0 0.0
    %415 = vmatpush1.msra.mxu0 0.0
    %416 = vmatprep.subr.mxu0 0.0
    %417 = vmatpush1.msra.mxu0 0.0
    %418 = vmatprep.subr.mxu0 0.0
    %419 = vmatpush1.msra.mxu0 0.0
    %420 = vmatprep.subr.mxu0 0.0
    %421 = vmatpush1.msra.mxu0 0.0
    %422 = vmatprep.subr.mxu0 0.0
    %423 = vmatpush1.msra.mxu0 0.0
    %424 = vmatprep.subr.mxu0 0.0
    %425 = vmatpush1.msra.mxu0 0.0
    %426 = vmatprep.subr.mxu0 0.0
    %427 = vmatpush1.msra.mxu0 0.0
    %428 = vmatprep.subr.mxu0 0.0
    %429 = vmatpush1.msra.mxu0 0.0
    %430 = vmatprep.subr.mxu0 0.0
    %431 = vmatpush1.msra.mxu0 0.0
    %432 = vmatprep.subr.mxu0 0.0
    %433 = vmatpush1.msra.mxu0 0.0
    %434 = vmatprep.subr.mxu0 0.0
    %435 = vmatpush1.msra.mxu0 0.0
    %436 = vmatprep.subr.mxu0 0.0
    %437 = vmatpush1.msra.mxu0 0.0
    %438 = vmatprep.mubr.f32.mxu0 0.0
    %439 = vmatmul.mubr.f32.gmra.mrb[0].mxu0 %v372
    %v440 = vpop.f32.mrb[0].mxu0
    %v441 = vadd.f32 %v370, %v440
    %v442 = vpop.f32.mrb[0].mxu0
    %443 = vdwg.mxu0
    %v444 = vmax.f32 %v441, 0.0
    %v445 = vld [vmem:[#allocation5 + $0xc0] sm:$0xff]
    %v446 = vld [vmem:[#allocation5 + $0xc8] sm:$0xff]
    %v447 = vld [vmem:[#allocation5 + $0xd0] sm:$0xff]
    %v448 = vld [vmem:[#allocation5 + $0xd8] sm:$0xff]
    %v449 = vld [vmem:[#allocation5 + $0xe0] sm:$0xff]
    %v450 = vld [vmem:[#allocation5 + $0xe8] sm:$0xff]
    %v451 = vld [vmem:[#allocation5 + $0xf0] sm:$0xff]
    %v452 = vld [vmem:[#allocation5 + $0xf8] sm:$0xff]
    %v453 = vld [vmem:[#allocation5 + $0x108] sm:$0x1]
    %v454 = vlaneseq
    %v455 = vshrl.u32 %v454, 7
    %v456 = vsub.s32 0, %v455
    %v457 = vrot.slane %v453, %v456
    %v459 = vsel %vm52, %v444, 0
    %461 = vmatprep.subr.mxu0 0.0
    %462 = vmatpush1.msra.mxu0 %v445
    %463 = vmatprep.subr.mxu0 0.0
    %464 = vmatpush1.msra.mxu0 %v446
    %465 = vmatprep.subr.mxu0 0.0
    %466 = vmatpush1.msra.mxu0 %v447
    %467 = vmatprep.subr.mxu0 0.0
    %468 = vmatpush1.msra.mxu0 %v448
    %469 = vmatprep.subr.mxu0 0.0
    %470 = vmatpush1.msra.mxu0 %v449
    %471 = vmatprep.subr.mxu0 0.0
    %472 = vmatpush1.msra.mxu0 %v450
    %473 = vmatprep.subr.mxu0 0.0
    %474 = vmatpush1.msra.mxu0 %v451
    %475 = vmatprep.subr.mxu0 0.0
    %476 = vmatpush1.msra.mxu0 %v452
    %477 = vmatprep.subr.mxu0 0.0
    %478 = vmatpush1.msra.mxu0 0.0
    %479 = vmatprep.subr.mxu0 0.0
    %480 = vmatpush1.msra.mxu0 0.0
    %481 = vmatprep.subr.mxu0 0.0
    %482 = vmatpush1.msra.mxu0 0.0
    %483 = vmatprep.subr.mxu0 0.0
    %484 = vmatpush1.msra.mxu0 0.0
    %485 = vmatprep.subr.mxu0 0.0
    %486 = vmatpush1.msra.mxu0 0.0
    %487 = vmatprep.subr.mxu0 0.0
    %488 = vmatpush1.msra.mxu0 0.0
    %489 = vmatprep.subr.mxu0 0.0
    %490 = vmatpush1.msra.mxu0 0.0
    %491 = vmatprep.subr.mxu0 0.0
    %492 = vmatpush1.msra.mxu0 0.0
    %493 = vmatprep.subr.mxu0 0.0
    %494 = vmatpush1.msra.mxu0 0.0
    %495 = vmatprep.subr.mxu0 0.0
    %496 = vmatpush1.msra.mxu0 0.0
    %497 = vmatprep.subr.mxu0 0.0
    %498 = vmatpush1.msra.mxu0 0.0
    %499 = vmatprep.subr.mxu0 0.0
    %500 = vmatpush1.msra.mxu0 0.0
    %501 = vmatprep.subr.mxu0 0.0
    %502 = vmatpush1.msra.mxu0 0.0
    %503 = vmatprep.subr.mxu0 0.0
    %504 = vmatpush1.msra.mxu0 0.0
    %505 = vmatprep.subr.mxu0 0.0
    %506 = vmatpush1.msra.mxu0 0.0
    %507 = vmatprep.subr.mxu0 0.0
    %508 = vmatpush1.msra.mxu0 0.0
    %509 = vmatprep.subr.mxu0 0.0
    %510 = vmatpush1.msra.mxu0 0.0
    %511 = vmatprep.subr.mxu0 0.0
    %512 = vmatpush1.msra.mxu0 0.0
    %513 = vmatprep.subr.mxu0 0.0
    %514 = vmatpush1.msra.mxu0 0.0
    %515 = vmatprep.subr.mxu0 0.0
    %516 = vmatpush1.msra.mxu0 0.0
    %517 = vmatprep.subr.mxu0 0.0
    %518 = vmatpush1.msra.mxu0 0.0
    %519 = vmatprep.subr.mxu0 0.0
    %520 = vmatpush1.msra.mxu0 0.0
    %521 = vmatprep.subr.mxu0 0.0
    %522 = vmatpush1.msra.mxu0 0.0
    %523 = vmatprep.subr.mxu0 0.0
    %524 = vmatpush1.msra.mxu0 0.0
    %525 = vmatprep.mubr.f32.mxu0 0.0
    %526 = vmatmul.mubr.f32.gmra.mrb[0].mxu0 %v459
    %v527 = vpop.f32.mrb[0].mxu0
    %v528 = vadd.f32 %v457, %v527
    %v529 = vpop.f32.mrb[0].mxu0
    %530 = vdwg.mxu0
    %531 = vst [vmem:[#allocation7] sm:$0xff] %v528
    // Predicated region
    $region18: #{tpu_custom_call.1} parent=1 // pred_check
      _
    $region19: #{tpu_custom_call.1} parent=1 // pred_check_branch
      %533 = sbr.rel (0) target = $region21
    $region20: #{tpu_custom_call.1} parent=1 // pred_region
      %s535 = ssub.s32 128, 128
      %536 = vsyncadd [#allocation4], %s535
      %s538 = sshll.u32 [#allocation7], 4
      %s539 = int_to_ptr.vmem [resolvable:$true] %s538
      %541 = dma.vmem_to_hbm [thread:$0]  %s539, 128, %s2, [#allocation4]
    $region21: #{tpu_custom_call.1} parent=1 // pred_fallthru
      _
    // Predicated region
    $region22: #{tpu_custom_call.1} parent=1 // pred_check
      _
    $region23: #{tpu_custom_call.1} parent=1 // pred_check_branch
      %543 = sbr.rel (0) target = $region25
    $region24: #{tpu_custom_call.1} parent=1 // pred_region
      %544 = dma.done [#allocation4], 128
    $region25: #{tpu_custom_call.1} parent=1 // pred_fallthru
      _
    %545 = vsyncpa [#allocation3], 1
    %546 = vsyncpa [#allocation6], 1
    %547 = vsyncpa [#allocation4], 1

</llo_original>
